<compile_context>
chip_gen: v5e
topology: v5e:2x2
jax: 0.10.0
libtpu: 0.0.40
codegen_flags: <defaults>
</compile_context>

<pallas_src>
import jax
import jax.numpy as jnp
import numpy as np
from jax.experimental import pallas as pl
from jax.experimental.pallas import tpu as pltpu

_LANES = 128      # lane width everything is padded to
_NEG = -1e30      # "minus infinity" for padded class lanes (finite -> no NaN)


def _round_up(x, m):
    return (x + m - 1) // m * m


# ------------------------------ Pallas kernel ------------------------------ #

def cnn_fused_kernel(x_ref, wc_ref, wfc_ref, b_ref, o_ref):
    """conv(1,1,d) + max_pool(M) + ReLU + fc1 + ReLU + fc2 + log_softmax.

    x_ref  : (M, TB, K*d)   batch tile of inputs, m-major leading axis
    wc_ref : (K*d, 128)     block-diagonal conv weight, lane-padded with zeros
    wfc_ref: (2, 128, 128)  [0] = fc1 weight (permuted, padded), [1] = fc2 weight
    b_ref  : (3, 128)       rows: conv bias (tiled) | fc1 bias | fc2 bias (pad=-1e30)
    o_ref  : (TB, 128)      lane-dense log-prob slab (classes in lanes 0..NC-1)
    """
    M = x_ref.shape[0]

    # Fused conv + max-pool: per-m MXU matmul, elementwise max accumulation.
    # x_ref[m] is a whole-sublane-tile (TB, K*d) slab (TB % 8 == 0), so no
    # sub-sublane slicing; live intermediate stays a single (TB, 128) slab.
    pooled = jnp.dot(x_ref[0], wc_ref[...], preferred_element_type=jnp.float32)
    for m in range(1, M):
        pooled = jnp.maximum(
            pooled,
            jnp.dot(x_ref[m], wc_ref[...], preferred_element_type=jnp.float32))

    # Conv bias after the max (bias constant over m), then ReLU.
    # Padded lanes (>= K*C) stay exactly 0.
    pooled = jnp.maximum(pooled + b_ref[0:1, :], 0.0)                     # (TB, 128)

    # fc1 -> ReLU.  Zero pad rows/cols of wfc[0] keep pad lanes at 0.
    h = jnp.dot(pooled, wfc_ref[0], preferred_element_type=jnp.float32) + b_ref[1:2, :]
    h = jnp.maximum(h, 0.0)
    # TODO(synk): F.dropout(training=self.training) is identity at inference; no RNG.

    # fc2 -> numerically stable log_softmax.  Padded class lanes carry a -1e30
    # bias, so they never win the max and contribute exp(...) == 0 to the lse.
    logits = jnp.dot(h, wfc_ref[1], preferred_element_type=jnp.float32) + b_ref[2:3, :]
    zmax = jnp.max(logits, axis=-1, keepdims=True)
    z = logits - zmax
    lse = jnp.log(jnp.sum(jnp.exp(z), axis=-1, keepdims=True))
    o_ref[...] = (z - lse).astype(o_ref.dtype)


# ------------------------------- Wrapper ----------------------------------- #

def cnn_forward(x_in, prepared, *, n_classes, row_tile=128):
    """x_in: (B, 1, K, M, d) NCDHW input; prepared: kernel-ready weight slabs."""
    wc, wfc, bias = prepared
    B, Cin, K, M, d = x_in.shape
    assert Cin == 1
    Kd = K * d

    # Batch-tile size: multiple of 8 sublanes, capped at row_tile (128 = v5e
    # MXU rows; also fine on v6e/v7x).  Grid over batch tiles is "parallel"
    # so v7x shards it across both TensorCores.
    TB = _round_up(min(row_tile, _round_up(B, 8)), 8)
    Bp = _round_up(B, TB)
    G = Bp // TB

    # NCDHW -> (M, Bp, K*d) slab: rows m-major so every per-m slab is whole
    # 8-sublane tiles inside the kernel.
    # NOTE(perf review): in production this reorder should be fused upstream /
    # the caller should hand us the slab directly; here it is one tiny fused
    # XLA copy feeding the pallas_call.
    x = jnp.transpose(x_in[:, 0], (2, 0, 1, 3)).reshape(M, B, Kd)
    x = jnp.pad(x, ((0, 0), (0, Bp - B), (0, 0)))

    flops = 2 * (M * Bp * Kd * _LANES + 2 * Bp * _LANES * _LANES)
    bytes_accessed = 4 * (x.size + wc.size + wfc.size + bias.size + Bp * _LANES)

    out = pl.pallas_call(
        cnn_fused_kernel,
        out_shape=jax.ShapeDtypeStruct((Bp, _LANES), jnp.float32),
        grid=(G,),
        in_specs=[
            pl.BlockSpec((M, TB, Kd), lambda i: (0, i, 0)),
            pl.BlockSpec((Kd, _LANES), lambda i: (0, 0)),
            pl.BlockSpec((2, _LANES, _LANES), lambda i: (0, 0, 0)),
            pl.BlockSpec((3, _LANES), lambda i: (0, 0)),
        ],
        out_specs=pl.BlockSpec((TB, _LANES), lambda i: (i, 0)),
        compiler_params=pltpu.CompilerParams(
            dimension_semantics=("parallel",)),
        cost_estimate=pl.CostEstimate(
            flops=flops,
            transcendentals=Bp * (_LANES + 1),
            bytes_accessed=bytes_accessed),
    )(x, wc, wfc, bias)

    # Slice the real batch rows / class lanes off the lane-dense slab.
    return out[:B, :n_classes]


# --------------------------- Parameter handling ----------------------------- #

def init_params(key, input_size, hidden_size, n_classes, d, n_kernels):
    """Torch-layout parameters (matching the PyTorch init semantics)."""
    C, H, NC, K = input_size, hidden_size, n_classes, n_kernels
    F_in = C * K
    ks = jax.random.split(key, 6)
    # Conv3d weight (C,1,1,1,d) squeezed to (C,d); xavier_uniform.
    cb = float(np.sqrt(6.0 / (d + C * d)))
    conv_w = jax.random.uniform(ks[0], (C, d), jnp.float32, -cb, cb)
    conv_b = jax.random.uniform(ks[1], (C,), jnp.float32,
                                -1.0 / np.sqrt(d), 1.0 / np.sqrt(d))
    # fc1 (H, C*K): xavier_normal
    fc1_w = jax.random.normal(ks[2], (H, F_in), jnp.float32) * np.sqrt(2.0 / (F_in + H))
    fc1_b = jax.random.uniform(ks[3], (H,), jnp.float32,
                               -1.0 / np.sqrt(F_in), 1.0 / np.sqrt(F_in))
    # fc2 (NC, H): xavier_normal
    fc2_w = jax.random.normal(ks[4], (NC, H), jnp.float32) * np.sqrt(2.0 / (H + NC))
    fc2_b = jax.random.uniform(ks[5], (NC,), jnp.float32,
                               -1.0 / np.sqrt(H), 1.0 / np.sqrt(H))
    return conv_w, conv_b, fc1_w, fc1_b, fc2_w, fc2_b


def prepare_params(params, n_kernels):
    """One-time repack of torch-layout params into 3 lane-dense kernel slabs."""
    conv_w, conv_b, fc1_w, fc1_b, fc2_w, fc2_b = params
    C, d = conv_w.shape
    H = fc1_w.shape[0]
    NC = fc2_w.shape[0]
    K = n_kernels
    KC = K * C
    assert K * d <= _LANES and KC <= _LANES and H <= _LANES and NC <= _LANES

    # Block-diagonal conv weight: block k = conv_w.T (d, C); lane-pad to 128
    # so every downstream intermediate is a lane-dense (rows, 128) slab.
    # (Fine while K*d <= one MXU pass; switch to (rows,d)@(d,C) if scaled up.)
    wc = jnp.kron(jnp.eye(K, dtype=conv_w.dtype), conv_w.T)              # (K*d, K*C)
    wc = jnp.pad(wc, ((0, 0), (0, _LANES - KC)))                         # (K*d, 128)

    # fc1 columns in torch order are c*K + k; pooled lane order is k*C + c.
    w1 = fc1_w.reshape(H, C, K).transpose(2, 1, 0).reshape(KC, H)        # (K*C, H)
    w1p = jnp.zeros((_LANES, _LANES), jnp.float32).at[:KC, :H].set(w1)
    w2p = jnp.zeros((_LANES, _LANES), jnp.float32).at[:H, :NC].set(fc2_w.T)
    wfc = jnp.stack([w1p, w2p])                                          # (2, 128, 128)

    # One bias slab: conv bias tiled K times (lane k*C+c = conv_b[c]), fc1
    # bias, fc2 bias with padded class lanes at -1e30.
    bias = jnp.stack([
        jnp.pad(jnp.tile(conv_b, K), (0, _LANES - KC)),
        jnp.pad(fc1_b, (0, _LANES - H)),
        jnp.pad(fc2_b, (0, _LANES - NC), constant_values=_NEG),
    ])                                                                   # (3, 128)
    return wc, wfc, bias


# ----------------------- Pure-JAX reference (check) ------------------------ #

def reference_forward(x_in, params):
    conv_w, conv_b, fc1_w, fc1_b, fc2_w, fc2_b = params
    hp = jax.lax.Precision.HIGHEST
    x = x_in[:, 0]                                                     # (B, K, M, d)
    conv = jnp.einsum("bkmd,cd->bckm", x, conv_w, precision=hp)
    conv = conv + conv_b[None, :, None, None]                          # (B, C, K, M)
    pooled = jnp.maximum(jnp.max(conv, axis=3), 0.0)                   # (B, C, K)
    flat = pooled.reshape(x.shape[0], -1)                              # (B, C*K)
    h = jnp.maximum(jnp.dot(flat, fc1_w.T, precision=hp) + fc1_b, 0.0)
    logits = jnp.dot(h, fc2_w.T, precision=hp) + fc2_b
    return jax.nn.log_softmax(logits, axis=1)


# --------------------------------- Main ------------------------------------ #

if __name__ == "__main__":
    B = 2
    input_size = 4          # conv out channels
    hidden_size = 32
    n_classes = 5
    d = 8
    n_kernels = 6
    max_n_communities = 7

    key = jax.random.PRNGKey(0)
    kx, kp = jax.random.split(key)
    # NCDHW: (B, 1, n_kernels, max_n_communities, d)
    x_in = jax.random.normal(kx, (B, 1, n_kernels, max_n_communities, d), jnp.float32)
    params = init_params(kp, input_size, hidden_size, n_classes, d, n_kernels)
    prepared = prepare_params(params, n_kernels)       # hoisted out of hot path

    fwd = jax.jit(lambda x, p: cnn_forward(x, p, n_classes=n_classes))
    out = jax.block_until_ready(fwd(x_in, prepared))

    ref = reference_forward(x_in, params)
    np.testing.assert_allclose(np.asarray(out), np.asarray(ref), atol=2e-3, rtol=2e-3)
    print("KERNEL_OK")
</pallas_src>

<mosaic_0001>
module attributes {stable_mosaic.version = 11 : i64} {
  func.func @cnn_fused_kernel(%arg0: i32, %arg1: memref<7x8x48xf32, #tpu.memory_space<vmem>>, %arg2: memref<48x128xf32, #tpu.memory_space<vmem>>, %arg3: memref<2x128x128xf32, #tpu.memory_space<vmem>>, %arg4: memref<3x128xf32, #tpu.memory_space<vmem>>, %arg5: memref<8x128xf32, #tpu.memory_space<vmem>>) attributes {dimension_semantics = [#tpu.dimension_semantics<parallel>], iteration_bounds = array<i64: 1>, scalar_prefetch = 0 : i64, scratch_operands = 0 : i64, tpu.core_type = #tpu.core_type<tc>, window_params = [{transform_indices = @transform_0, window_bounds = array<i64: 7, 8, 48>}, {pipeline_mode = #tpu.pipeline_mode<synchronous>, transform_indices = @transform_1, window_bounds = array<i64: 48, 128>}, {pipeline_mode = #tpu.pipeline_mode<synchronous>, transform_indices = @transform_2, window_bounds = array<i64: 2, 128, 128>}, {pipeline_mode = #tpu.pipeline_mode<synchronous>, transform_indices = @transform_3, window_bounds = array<i64: 3, 128>}, {transform_indices = @transform_4, window_bounds = array<i64: 8, 128>}]} {
    %c0 = arith.constant 0 : index
    %c0_0 = arith.constant 0 : index
    %c0_1 = arith.constant 0 : index
    %0 = vector.load %arg1[%c0, %c0_0, %c0_1] : memref<7x8x48xf32, #tpu.memory_space<vmem>>, vector<1x8x48xf32>
    %1 = vector.shape_cast %0 : vector<1x8x48xf32> to vector<8x48xf32>
    %c0_2 = arith.constant 0 : index
    %c0_3 = arith.constant 0 : index
    %2 = vector.load %arg2[%c0_2, %c0_3] : memref<48x128xf32, #tpu.memory_space<vmem>>, vector<48x128xf32>
    %cst = arith.constant dense<0.000000e+00> : vector<8x128xf32>
    %3 = tpu.matmul %1, %2, %cst {dimension_numbers = #tpu.dot_dimension_numbers<[1], [0], [0], [1], [0, 0, 1, 1], [], []>} : vector<8x48xf32>, vector<48x128xf32>, vector<8x128xf32> -> vector<8x128xf32>
    %c1 = arith.constant 1 : index
    %c0_4 = arith.constant 0 : index
    %c0_5 = arith.constant 0 : index
    %4 = vector.load %arg1[%c1, %c0_4, %c0_5] : memref<7x8x48xf32, #tpu.memory_space<vmem>>, vector<1x8x48xf32>
    %5 = vector.shape_cast %4 : vector<1x8x48xf32> to vector<8x48xf32>
    %c0_6 = arith.constant 0 : index
    %c0_7 = arith.constant 0 : index
    %6 = vector.load %arg2[%c0_6, %c0_7] : memref<48x128xf32, #tpu.memory_space<vmem>>, vector<48x128xf32>
    %cst_8 = arith.constant dense<0.000000e+00> : vector<8x128xf32>
    %7 = tpu.matmul %5, %6, %cst_8 {dimension_numbers = #tpu.dot_dimension_numbers<[1], [0], [0], [1], [0, 0, 1, 1], [], []>} : vector<8x48xf32>, vector<48x128xf32>, vector<8x128xf32> -> vector<8x128xf32>
    %8 = arith.maximumf %3, %7 : vector<8x128xf32>
    %c2 = arith.constant 2 : index
    %c0_9 = arith.constant 0 : index
    %c0_10 = arith.constant 0 : index
    %9 = vector.load %arg1[%c2, %c0_9, %c0_10] : memref<7x8x48xf32, #tpu.memory_space<vmem>>, vector<1x8x48xf32>
    %10 = vector.shape_cast %9 : vector<1x8x48xf32> to vector<8x48xf32>
    %c0_11 = arith.constant 0 : index
    %c0_12 = arith.constant 0 : index
    %11 = vector.load %arg2[%c0_11, %c0_12] : memref<48x128xf32, #tpu.memory_space<vmem>>, vector<48x128xf32>
    %cst_13 = arith.constant dense<0.000000e+00> : vector<8x128xf32>
    %12 = tpu.matmul %10, %11, %cst_13 {dimension_numbers = #tpu.dot_dimension_numbers<[1], [0], [0], [1], [0, 0, 1, 1], [], []>} : vector<8x48xf32>, vector<48x128xf32>, vector<8x128xf32> -> vector<8x128xf32>
    %13 = arith.maximumf %8, %12 : vector<8x128xf32>
    %c3 = arith.constant 3 : index
    %c0_14 = arith.constant 0 : index
    %c0_15 = arith.constant 0 : index
    %14 = vector.load %arg1[%c3, %c0_14, %c0_15] : memref<7x8x48xf32, #tpu.memory_space<vmem>>, vector<1x8x48xf32>
    %15 = vector.shape_cast %14 : vector<1x8x48xf32> to vector<8x48xf32>
    %c0_16 = arith.constant 0 : index
    %c0_17 = arith.constant 0 : index
    %16 = vector.load %arg2[%c0_16, %c0_17] : memref<48x128xf32, #tpu.memory_space<vmem>>, vector<48x128xf32>
    %cst_18 = arith.constant dense<0.000000e+00> : vector<8x128xf32>
    %17 = tpu.matmul %15, %16, %cst_18 {dimension_numbers = #tpu.dot_dimension_numbers<[1], [0], [0], [1], [0, 0, 1, 1], [], []>} : vector<8x48xf32>, vector<48x128xf32>, vector<8x128xf32> -> vector<8x128xf32>
    %18 = arith.maximumf %13, %17 : vector<8x128xf32>
    %c4 = arith.constant 4 : index
    %c0_19 = arith.constant 0 : index
    %c0_20 = arith.constant 0 : index
    %19 = vector.load %arg1[%c4, %c0_19, %c0_20] : memref<7x8x48xf32, #tpu.memory_space<vmem>>, vector<1x8x48xf32>
    %20 = vector.shape_cast %19 : vector<1x8x48xf32> to vector<8x48xf32>
    %c0_21 = arith.constant 0 : index
    %c0_22 = arith.constant 0 : index
    %21 = vector.load %arg2[%c0_21, %c0_22] : memref<48x128xf32, #tpu.memory_space<vmem>>, vector<48x128xf32>
    %cst_23 = arith.constant dense<0.000000e+00> : vector<8x128xf32>
    %22 = tpu.matmul %20, %21, %cst_23 {dimension_numbers = #tpu.dot_dimension_numbers<[1], [0], [0], [1], [0, 0, 1, 1], [], []>} : vector<8x48xf32>, vector<48x128xf32>, vector<8x128xf32> -> vector<8x128xf32>
    %23 = arith.maximumf %18, %22 : vector<8x128xf32>
    %c5 = arith.constant 5 : index
    %c0_24 = arith.constant 0 : index
    %c0_25 = arith.constant 0 : index
    %24 = vector.load %arg1[%c5, %c0_24, %c0_25] : memref<7x8x48xf32, #tpu.memory_space<vmem>>, vector<1x8x48xf32>
    %25 = vector.shape_cast %24 : vector<1x8x48xf32> to vector<8x48xf32>
    %c0_26 = arith.constant 0 : index
    %c0_27 = arith.constant 0 : index
    %26 = vector.load %arg2[%c0_26, %c0_27] : memref<48x128xf32, #tpu.memory_space<vmem>>, vector<48x128xf32>
    %cst_28 = arith.constant dense<0.000000e+00> : vector<8x128xf32>
    %27 = tpu.matmul %25, %26, %cst_28 {dimension_numbers = #tpu.dot_dimension_numbers<[1], [0], [0], [1], [0, 0, 1, 1], [], []>} : vector<8x48xf32>, vector<48x128xf32>, vector<8x128xf32> -> vector<8x128xf32>
    %28 = arith.maximumf %23, %27 : vector<8x128xf32>
    %c6 = arith.constant 6 : index
    %c0_29 = arith.constant 0 : index
    %c0_30 = arith.constant 0 : index
    %29 = vector.load %arg1[%c6, %c0_29, %c0_30] : memref<7x8x48xf32, #tpu.memory_space<vmem>>, vector<1x8x48xf32>
    %30 = vector.shape_cast %29 : vector<1x8x48xf32> to vector<8x48xf32>
    %c0_31 = arith.constant 0 : index
    %c0_32 = arith.constant 0 : index
    %31 = vector.load %arg2[%c0_31, %c0_32] : memref<48x128xf32, #tpu.memory_space<vmem>>, vector<48x128xf32>
    %cst_33 = arith.constant dense<0.000000e+00> : vector<8x128xf32>
    %32 = tpu.matmul %30, %31, %cst_33 {dimension_numbers = #tpu.dot_dimension_numbers<[1], [0], [0], [1], [0, 0, 1, 1], [], []>} : vector<8x48xf32>, vector<48x128xf32>, vector<8x128xf32> -> vector<8x128xf32>
    %33 = arith.maximumf %28, %32 : vector<8x128xf32>
    %c0_34 = arith.constant 0 : index
    %c0_35 = arith.constant 0 : index
    %34 = vector.load %arg4[%c0_34, %c0_35] : memref<3x128xf32, #tpu.memory_space<vmem>>, vector<1x128xf32>
    %35 = vector.broadcast %34 : vector<1x128xf32> to vector<8x128xf32>
    %36 = arith.addf %33, %35 : vector<8x128xf32>
    %cst_36 = arith.constant 0.000000e+00 : f32
    %37 = vector.broadcast %cst_36 : f32 to vector<8x128xf32>
    %38 = arith.maximumf %36, %37 : vector<8x128xf32>
    %c0_37 = arith.constant 0 : index
    %c0_38 = arith.constant 0 : index
    %c0_39 = arith.constant 0 : index
    %39 = vector.load %arg3[%c0_37, %c0_38, %c0_39] : memref<2x128x128xf32, #tpu.memory_space<vmem>>, vector<1x128x128xf32>
    %40 = vector.shape_cast %39 : vector<1x128x128xf32> to vector<128x128xf32>
    %cst_40 = arith.constant dense<0.000000e+00> : vector<8x128xf32>
    %41 = tpu.matmul %38, %40, %cst_40 {dimension_numbers = #tpu.dot_dimension_numbers<[1], [0], [0], [1], [0, 0, 1, 1], [], []>} : vector<8x128xf32>, vector<128x128xf32>, vector<8x128xf32> -> vector<8x128xf32>
    %c1_41 = arith.constant 1 : index
    %c0_42 = arith.constant 0 : index
    %42 = vector.load %arg4[%c1_41, %c0_42] : memref<3x128xf32, #tpu.memory_space<vmem>>, vector<1x128xf32>
    %43 = vector.broadcast %42 : vector<1x128xf32> to vector<8x128xf32>
    %44 = arith.addf %41, %43 : vector<8x128xf32>
    %cst_43 = arith.constant 0.000000e+00 : f32
    %45 = vector.broadcast %cst_43 : f32 to vector<8x128xf32>
    %46 = arith.maximumf %44, %45 : vector<8x128xf32>
    %c1_44 = arith.constant 1 : index
    %c0_45 = arith.constant 0 : index
    %c0_46 = arith.constant 0 : index
    %47 = vector.load %arg3[%c1_44, %c0_45, %c0_46] : memref<2x128x128xf32, #tpu.memory_space<vmem>>, vector<1x128x128xf32>
    %48 = vector.shape_cast %47 : vector<1x128x128xf32> to vector<128x128xf32>
    %cst_47 = arith.constant dense<0.000000e+00> : vector<8x128xf32>
    %49 = tpu.matmul %46, %48, %cst_47 {dimension_numbers = #tpu.dot_dimension_numbers<[1], [0], [0], [1], [0, 0, 1, 1], [], []>} : vector<8x128xf32>, vector<128x128xf32>, vector<8x128xf32> -> vector<8x128xf32>
    %c2_48 = arith.constant 2 : index
    %c0_49 = arith.constant 0 : index
    %50 = vector.load %arg4[%c2_48, %c0_49] : memref<3x128xf32, #tpu.memory_space<vmem>>, vector<1x128xf32>
    %51 = vector.broadcast %50 : vector<1x128xf32> to vector<8x128xf32>
    %52 = arith.addf %49, %51 : vector<8x128xf32>
    %cst_50 = arith.constant dense<0xFF800000> : vector<8xf32>
    %53 = vector.multi_reduction <maximumf>, %52, %cst_50 [1] : vector<8x128xf32> to vector<8xf32>
    %54 = vector.shape_cast %53 : vector<8xf32> to vector<8x1xf32>
    %55 = vector.broadcast %54 : vector<8x1xf32> to vector<8x128xf32>
    %56 = arith.subf %52, %55 : vector<8x128xf32>
    %57 = math.exp %56 : vector<8x128xf32>
    %cst_51 = arith.constant dense<0.000000e+00> : vector<8xf32>
    %58 = vector.multi_reduction <add>, %57, %cst_51 [1] : vector<8x128xf32> to vector<8xf32>
    %59 = vector.shape_cast %58 : vector<8xf32> to vector<8x1xf32>
    %60 = math.log %59 : vector<8x1xf32>
    %61 = vector.broadcast %60 : vector<8x1xf32> to vector<8x128xf32>
    %62 = arith.subf %56, %61 : vector<8x128xf32>
    %c0_52 = arith.constant 0 : index
    %c0_53 = arith.constant 0 : index
    %63 = vector.load %arg5[%c0_52, %c0_53] : memref<8x128xf32, #tpu.memory_space<vmem>>, vector<8x128xf32>
    tpu.vector_store %arg5[%c0_52, %c0_53], %62 {strides = array<i32>} : memref<8x128xf32, #tpu.memory_space<vmem>>, vector<8x128xf32>,
    return
  }
  func.func @transform_0(%arg0: i32) -> (i32, i32, i32) {
    %c0_i32 = arith.constant 0 : i32
    %c0_i32_0 = arith.constant 0 : i32
    %c0_i32_1 = arith.constant 0 : i32
    return %c0_i32, %arg0, %c0_i32_0 : i32, i32, i32
  }
  func.func @transform_1(%arg0: i32) -> (i32, i32) {
    %c0_i32 = arith.constant 0 : i32
    %c0_i32_0 = arith.constant 0 : i32
    %c0_i32_1 = arith.constant 0 : i32
    return %c0_i32, %c0_i32_0 : i32, i32
  }
  func.func @transform_2(%arg0: i32) -> (i32, i32, i32) {
    %c0_i32 = arith.constant 0 : i32
    %c0_i32_0 = arith.constant 0 : i32
    %c0_i32_1 = arith.constant 0 : i32
    %c0_i32_2 = arith.constant 0 : i32
    return %c0_i32, %c0_i32_0, %c0_i32_1 : i32, i32, i32
  }
  func.func @transform_3(%arg0: i32) -> (i32, i32) {
    %c0_i32 = arith.constant 0 : i32
    %c0_i32_0 = arith.constant 0 : i32
    %c0_i32_1 = arith.constant 0 : i32
    return %c0_i32, %c0_i32_0 : i32, i32
  }
  func.func @transform_4(%arg0: i32) -> (i32, i32) {
    %c0_i32 = arith.constant 0 : i32
    %c0_i32_0 = arith.constant 0 : i32
    return %arg0, %c0_i32 : i32, i32
  }
}

</mosaic_0001>

<llo_original>
// kernel: _lambda_.1
$region0: #{_lambda_.1}
  #allocation0 [shape = 'u32[]', space=smem, size = 0x4, offset = 0x4, fixed_abs, tag = 'smem constant byte address 0x4 - core index']
  #allocation1 [shape = 'u32[72,128]{1,0:T(1,128)}', space=vmem, size = 0x9000, scoped, tag = 'internal scratch']
  %s0 = inlined_call_operand.vmem [shape: f32[7,8,48], index: 0, kind: input, shape index: {}]
  %s1 = inlined_call_operand.vmem [shape: f32[48,128], index: 1, kind: input, shape index: {}]
  %s2 = inlined_call_operand.vmem [shape: f32[2,128,128], index: 2, kind: input, shape index: {}]
  %s3 = inlined_call_operand.vmem [shape: f32[3,128], index: 3, kind: input, shape index: {}]
  %s4 = inlined_call_operand.vmem [shape: f32[8,128], index: 4, kind: output, shape index: {}]
  %s5 = sld [smem:[#allocation0]]
  $region26: #{_lambda_.1} parent=0
    _
  %s7 = ssub.s32 1, %s5
  %s8 = scalar_select 0, %s7, %s5
  // Predicated region
  $region2: #{_lambda_.1} parent=0 // pred_check
    _
  $region3: #{_lambda_.1} parent=0 // pred_check_branch
    %10 = sbr.rel (0) target = $region5
  $region4: #{_lambda_.1} parent=0 // pred_region
    _
  $region5: #{_lambda_.1} parent=0 // pred_fallthru
    _
  // Predicated region
  $region6: #{_lambda_.1} parent=0 // pred_check
    _
  $region7: #{_lambda_.1} parent=0 // pred_check_branch
    %12 = sbr.rel (0) target = $region9
  $region8: #{_lambda_.1} parent=0 // pred_region
    _
  $region9: #{_lambda_.1} parent=0 // pred_fallthru
    _
  // Predicated region
  $region10: #{_lambda_.1} parent=0 // pred_check
    _
  $region11: #{_lambda_.1} parent=0 // pred_check_branch
    %14 = sbr.rel (0) target = $region13
  $region12: #{_lambda_.1} parent=0 // pred_region
    _
  $region13: #{_lambda_.1} parent=0 // pred_fallthru
    _
  // Predicated region
  $region14: #{_lambda_.1} parent=0 // pred_check
    _
  $region15: #{_lambda_.1} parent=0 // pred_check_branch
    %16 = sbr.rel (0) target = $region17
  $region16: #{_lambda_.1} parent=0 // pred_region
    _
  $region17: #{_lambda_.1} parent=0 // pred_fallthru
    _
  %v17 = vld [vmem:[%s0] sm:$0xff]
  %v18 = vld [vmem:[%s1] sm:$0xff]
  %v19 = vld [vmem:[%s1 + $0x8] sm:$0xff]
  %v20 = vld [vmem:[%s1 + $0x10] sm:$0xff]
  %v21 = vld [vmem:[%s1 + $0x18] sm:$0xff]
  %v22 = vld [vmem:[%s1 + $0x20] sm:$0xff]
  %v23 = vld [vmem:[%s1 + $0x28] sm:$0xff]
  %vm24 = vcmask 392192
  %v26 = vsel %vm24, %v17, 0
  %28 = vmatpush.msra.mxu0 0.0
  %29 = vmatpush.msra.mxu0 0.0
  %30 = vmatpush.msra.mxu0 0.0
  %31 = vmatpush.msra.mxu0 0.0
  %32 = vmatpush.msra.mxu0 0.0
  %33 = vmatpush.msra.mxu0 0.0
  %34 = vmatpush.msra.mxu0 0.0
  %35 = vmatpush.msra.mxu0 0.0
  %36 = vmatpush.msra.mxu0 0.0
  %37 = vmatpush.msra.mxu0 0.0
  %38 = vmatpush.msra.mxu0 %v23
  %39 = vmatpush.msra.mxu0 %v22
  %40 = vmatpush.msra.mxu0 %v21
  %41 = vmatpush.msra.mxu0 %v20
  %42 = vmatpush.msra.mxu0 %v19
  %43 = vmatpush.msra.mxu0 %v18
  %44 = vmatmul.f32.gmra.mxu0 %v26
  %v45 = vpop.f32.mrf.mxu0
  %v46 = vadd.f32 0.0, %v45
  %47 = vdwg.mxu0
  %s48 = scalar_lea.vmem %s0, 8
  %v49 = vld [vmem:[%s48] sm:$0xff]
  %v51 = vsel %vm24, %v49, 0
  %53 = vmatpush.msra.mxu0 0.0
  %54 = vmatpush.msra.mxu0 0.0
  %55 = vmatpush.msra.mxu0 0.0
  %56 = vmatpush.msra.mxu0 0.0
  %57 = vmatpush.msra.mxu0 0.0
  %58 = vmatpush.msra.mxu0 0.0
  %59 = vmatpush.msra.mxu0 0.0
  %60 = vmatpush.msra.mxu0 0.0
  %61 = vmatpush.msra.mxu0 0.0
  %62 = vmatpush.msra.mxu0 0.0
  %63 = vmatpush.msra.mxu0 %v23
  %64 = vmatpush.msra.mxu0 %v22
  %65 = vmatpush.msra.mxu0 %v21
  %66 = vmatpush.msra.mxu0 %v20
  %67 = vmatpush.msra.mxu0 %v19
  %68 = vmatpush.msra.mxu0 %v18
  %69 = vmatmul.f32.gmra.mxu0 %v51
  %v70 = vpop.f32.mrf.mxu0
  %v71 = vadd.f32 0.0, %v70
  %72 = vdwg.mxu0
  %v73 = vmax.f32 %v46, %v71
  %s74 = scalar_lea.vmem %s0, 16
  %v75 = vld [vmem:[%s74] sm:$0xff]
  %v77 = vsel %vm24, %v75, 0
  %79 = vmatpush.msra.mxu0 0.0
  %80 = vmatpush.msra.mxu0 0.0
  %81 = vmatpush.msra.mxu0 0.0
  %82 = vmatpush.msra.mxu0 0.0
  %83 = vmatpush.msra.mxu0 0.0
  %84 = vmatpush.msra.mxu0 0.0
  %85 = vmatpush.msra.mxu0 0.0
  %86 = vmatpush.msra.mxu0 0.0
  %87 = vmatpush.msra.mxu0 0.0
  %88 = vmatpush.msra.mxu0 0.0
  %89 = vmatpush.msra.mxu0 %v23
  %90 = vmatpush.msra.mxu0 %v22
  %91 = vmatpush.msra.mxu0 %v21
  %92 = vmatpush.msra.mxu0 %v20
  %93 = vmatpush.msra.mxu0 %v19
  %94 = vmatpush.msra.mxu0 %v18
  %95 = vmatmul.f32.gmra.mxu0 %v77
  %v96 = vpop.f32.mrf.mxu0
  %v97 = vadd.f32 0.0, %v96
  %98 = vdwg.mxu0
  %v99 = vmax.f32 %v73, %v97
  %s100 = scalar_lea.vmem %s0, 24
  %v101 = vld [vmem:[%s100] sm:$0xff]
  %v103 = vsel %vm24, %v101, 0
  %105 = vmatpush.msra.mxu0 0.0
  %106 = vmatpush.msra.mxu0 0.0
  %107 = vmatpush.msra.mxu0 0.0
  %108 = vmatpush.msra.mxu0 0.0
  %109 = vmatpush.msra.mxu0 0.0
  %110 = vmatpush.msra.mxu0 0.0
  %111 = vmatpush.msra.mxu0 0.0
  %112 = vmatpush.msra.mxu0 0.0
  %113 = vmatpush.msra.mxu0 0.0
  %114 = vmatpush.msra.mxu0 0.0
  %115 = vmatpush.msra.mxu0 %v23
  %116 = vmatpush.msra.mxu0 %v22
  %117 = vmatpush.msra.mxu0 %v21
  %118 = vmatpush.msra.mxu0 %v20
  %119 = vmatpush.msra.mxu0 %v19
  %120 = vmatpush.msra.mxu0 %v18
  %121 = vmatmul.f32.gmra.mxu0 %v103
  %v122 = vpop.f32.mrf.mxu0
  %v123 = vadd.f32 0.0, %v122
  %124 = vdwg.mxu0
  %v125 = vmax.f32 %v99, %v123
  %s126 = scalar_lea.vmem %s0, 32
  %v127 = vld [vmem:[%s126] sm:$0xff]
  %v129 = vsel %vm24, %v127, 0
  %131 = vmatpush.msra.mxu0 0.0
  %132 = vmatpush.msra.mxu0 0.0
  %133 = vmatpush.msra.mxu0 0.0
  %134 = vmatpush.msra.mxu0 0.0
  %135 = vmatpush.msra.mxu0 0.0
  %136 = vmatpush.msra.mxu0 0.0
  %137 = vmatpush.msra.mxu0 0.0
  %138 = vmatpush.msra.mxu0 0.0
  %139 = vmatpush.msra.mxu0 0.0
  %140 = vmatpush.msra.mxu0 0.0
  %141 = vmatpush.msra.mxu0 %v23
  %142 = vmatpush.msra.mxu0 %v22
  %143 = vmatpush.msra.mxu0 %v21
  %144 = vmatpush.msra.mxu0 %v20
  %145 = vmatpush.msra.mxu0 %v19
  %146 = vmatpush.msra.mxu0 %v18
  %147 = vmatmul.f32.gmra.mxu0 %v129
  %v148 = vpop.f32.mrf.mxu0
  %v149 = vadd.f32 0.0, %v148
  %150 = vdwg.mxu0
  %v151 = vmax.f32 %v125, %v149
  %s152 = scalar_lea.vmem %s0, 40
  %v153 = vld [vmem:[%s152] sm:$0xff]
  %v155 = vsel %vm24, %v153, 0
  %157 = vmatpush.msra.mxu0 0.0
  %158 = vmatpush.msra.mxu0 0.0
  %159 = vmatpush.msra.mxu0 0.0
  %160 = vmatpush.msra.mxu0 0.0
  %161 = vmatpush.msra.mxu0 0.0
  %162 = vmatpush.msra.mxu0 0.0
  %163 = vmatpush.msra.mxu0 0.0
  %164 = vmatpush.msra.mxu0 0.0
  %165 = vmatpush.msra.mxu0 0.0
  %166 = vmatpush.msra.mxu0 0.0
  %167 = vmatpush.msra.mxu0 %v23
  %168 = vmatpush.msra.mxu0 %v22
  %169 = vmatpush.msra.mxu0 %v21
  %170 = vmatpush.msra.mxu0 %v20
  %171 = vmatpush.msra.mxu0 %v19
  %172 = vmatpush.msra.mxu0 %v18
  %173 = vmatmul.f32.gmra.mxu0 %v155
  %v174 = vpop.f32.mrf.mxu0
  %v175 = vadd.f32 0.0, %v174
  %176 = vdwg.mxu0
  %v177 = vmax.f32 %v151, %v175
  %s178 = scalar_lea.vmem %s0, 48
  %v179 = vld [vmem:[%s178] sm:$0xff]
  %v181 = vsel %vm24, %v179, 0
  %183 = vmatpush.msra.mxu0 0.0
  %184 = vmatpush.msra.mxu0 0.0
  %185 = vmatpush.msra.mxu0 0.0
  %186 = vmatpush.msra.mxu0 0.0
  %187 = vmatpush.msra.mxu0 0.0
  %188 = vmatpush.msra.mxu0 0.0
  %189 = vmatpush.msra.mxu0 0.0
  %190 = vmatpush.msra.mxu0 0.0
  %191 = vmatpush.msra.mxu0 0.0
  %192 = vmatpush.msra.mxu0 0.0
  %193 = vmatpush.msra.mxu0 %v23
  %194 = vmatpush.msra.mxu0 %v22
  %195 = vmatpush.msra.mxu0 %v21
  %196 = vmatpush.msra.mxu0 %v20
  %197 = vmatpush.msra.mxu0 %v19
  %198 = vmatpush.msra.mxu0 %v18
  %199 = vmatmul.f32.gmra.mxu0 %v181
  %v200 = vpop.f32.mrf.mxu0
  %v201 = vadd.f32 0.0, %v200
  %202 = vdwg.mxu0
  %v203 = vmax.f32 %v177, %v201
  %v204 = vld [vmem:[%s3] sm:$0x1]
  %v205 = vperm.slane %v204, 0
  %v206 = vadd.f32 %v203, %v205
  %v207 = vmax.f32 %v206, 0.0
  %v208 = vld [vmem:[%s2] sm:$0xff]
  %v209 = vld [vmem:[%s2 + $0x8] sm:$0xff]
  %v210 = vld [vmem:[%s2 + $0x10] sm:$0xff]
  %v211 = vld [vmem:[%s2 + $0x18] sm:$0xff]
  %v212 = vld [vmem:[%s2 + $0x20] sm:$0xff]
  %v213 = vld [vmem:[%s2 + $0x28] sm:$0xff]
  %v214 = vld [vmem:[%s2 + $0x30] sm:$0xff]
  %v215 = vld [vmem:[%s2 + $0x38] sm:$0xff]
  %v216 = vld [vmem:[%s2 + $0x40] sm:$0xff]
  %v217 = vld [vmem:[%s2 + $0x48] sm:$0xff]
  %v218 = vld [vmem:[%s2 + $0x50] sm:$0xff]
  %v219 = vld [vmem:[%s2 + $0x58] sm:$0xff]
  %v220 = vld [vmem:[%s2 + $0x60] sm:$0xff]
  %v221 = vld [vmem:[%s2 + $0x68] sm:$0xff]
  %v222 = vld [vmem:[%s2 + $0x70] sm:$0xff]
  %v223 = vld [vmem:[%s2 + $0x78] sm:$0xff]
  %v224 = vld [vmem:[%s3 + $0x1] sm:$0x1]
  %v225 = vperm.slane %v224, 0
  %226 = vmatpush.msra.mxu0 %v223
  %227 = vmatpush.msra.mxu0 %v222
  %228 = vmatpush.msra.mxu0 %v221
  %229 = vmatpush.msra.mxu0 %v220
  %230 = vmatpush.msra.mxu0 %v219
  %231 = vmatpush.msra.mxu0 %v218
  %232 = vmatpush.msra.mxu0 %v217
  %233 = vmatpush.msra.mxu0 %v216
  %234 = vmatpush.msra.mxu0 %v215
  %235 = vmatpush.msra.mxu0 %v214
  %236 = vmatpush.msra.mxu0 %v213
  %237 = vmatpush.msra.mxu0 %v212
  %238 = vmatpush.msra.mxu0 %v211
  %239 = vmatpush.msra.mxu0 %v210
  %240 = vmatpush.msra.mxu0 %v209
  %241 = vmatpush.msra.mxu0 %v208
  %242 = vmatmul.f32.gmra.mxu0 %v207
  %v243 = vpop.f32.mrf.mxu0
  %v244 = vadd.f32 %v225, %v243
  %245 = vdwg.mxu0
  %v246 = vmax.f32 %v244, 0.0
  %s247 = scalar_lea.vmem %s2, 128
  %v248 = vld [vmem:[%s247] sm:$0xff]
  %v249 = vld [vmem:[%s247 + $0x8] sm:$0xff]
  %v250 = vld [vmem:[%s247 + $0x10] sm:$0xff]
  %v251 = vld [vmem:[%s247 + $0x18] sm:$0xff]
  %v252 = vld [vmem:[%s247 + $0x20] sm:$0xff]
  %v253 = vld [vmem:[%s247 + $0x28] sm:$0xff]
  %v254 = vld [vmem:[%s247 + $0x30] sm:$0xff]
  %v255 = vld [vmem:[%s247 + $0x38] sm:$0xff]
  %v256 = vld [vmem:[%s247 + $0x40] sm:$0xff]
  %v257 = vld [vmem:[%s247 + $0x48] sm:$0xff]
  %v258 = vld [vmem:[%s247 + $0x50] sm:$0xff]
  %v259 = vld [vmem:[%s247 + $0x58] sm:$0xff]
  %v260 = vld [vmem:[%s247 + $0x60] sm:$0xff]
  %v261 = vld [vmem:[%s247 + $0x68] sm:$0xff]
  %v262 = vld [vmem:[%s247 + $0x70] sm:$0xff]
  %v263 = vld [vmem:[%s247 + $0x78] sm:$0xff]
  %v264 = vld [vmem:[%s3 + $0x2] sm:$0x1]
  %v265 = vperm.slane %v264, 0
  %266 = vmatpush.msra.mxu0 %v263
  %267 = vmatpush.msra.mxu0 %v262
  %268 = vmatpush.msra.mxu0 %v261
  %269 = vmatpush.msra.mxu0 %v260
  %270 = vmatpush.msra.mxu0 %v259
  %271 = vmatpush.msra.mxu0 %v258
  %272 = vmatpush.msra.mxu0 %v257
  %273 = vmatpush.msra.mxu0 %v256
  %274 = vmatpush.msra.mxu0 %v255
  %275 = vmatpush.msra.mxu0 %v254
  %276 = vmatpush.msra.mxu0 %v253
  %277 = vmatpush.msra.mxu0 %v252
  %278 = vmatpush.msra.mxu0 %v251
  %279 = vmatpush.msra.mxu0 %v250
  %280 = vmatpush.msra.mxu0 %v249
  %281 = vmatpush.msra.mxu0 %v248
  %282 = vmatmul.f32.gmra.mxu0 %v246
  %v283 = vpop.f32.mrf.mxu0
  %v284 = vadd.f32 %v265, %v283
  %285 = vdwg.mxu0
  %286 = vmax.xlane.f32.xlu0 %v284
  %v287 = vpop.xlane.xlu0 %286
  %v288 = vsub.f32 %v284, %v287
  %v289 = vmul.f32 %v288, 1.442695
  %v290 = vpow.pop %v289
  %291 = vadd.xlane.f32.xlu0 %v290
  %v292 = vpop.xlane.xlu0 %291
  %v293 = vlog2.pop %v292
  %v294 = vmul.f32 %v293, 0.6931472
  %v295 = vsub.f32 %v288, %v294
  %296 = vst [vmem:[%s4] sm:$0xff] %v295
  // Predicated region
  $region18: #{_lambda_.1} parent=0 // pred_check
    _
  $region19: #{_lambda_.1} parent=0 // pred_check_branch
    %298 = sbr.rel (0) target = $region21
  $region20: #{_lambda_.1} parent=0 // pred_region
    _
  $region21: #{_lambda_.1} parent=0 // pred_fallthru
    _
  // Predicated region
  $region22: #{_lambda_.1} parent=0 // pred_check
    _
  $region23: #{_lambda_.1} parent=0 // pred_check_branch
    %300 = sbr.rel (0) target = $region25
  $region24: #{_lambda_.1} parent=0 // pred_region
    _
  $region25: #{_lambda_.1} parent=0 // pred_fallthru
    _

</llo_original>
